<compile_context>
chip_gen: v7x
topology: tpu7x:2x2x1
jax: 0.10.0
libtpu: 0.0.40
codegen_flags: <defaults>
</compile_context>

<pallas_src>
import numpy as np
import jax
import jax.numpy as jnp
from jax.experimental import pallas as pl
from jax.experimental.pallas import tpu as pltpu


# -----------------------------------------------------------------------------
# Deterministic Haar synthesis matrices (mirrors IDWT.generate_mat semantics).
# -----------------------------------------------------------------------------
def build_haar_idwt_matrices(full_h: int, full_w: int):
    """full_h = 2*h, full_w = 2*w. Returns (low_0, low_1, high_0, high_1)."""
    c = 1.0 / np.sqrt(2.0)
    band_low = [c, c]      # reversed pywt haar rec_lo
    band_high = [-c, c]    # reversed pywt haar rec_hi
    band_len = 2

    max_side = max(full_h, full_w)
    half = max_side // 2

    mat_h = np.zeros((half, max_side + band_len - 2), dtype=np.float32)
    idx = 0
    for i in range(half):
        for j in range(band_len):
            mat_h[i, idx + j] = band_low[j]
        idx += band_len

    mat_w = np.zeros((max_side - half, max_side + band_len - 2), dtype=np.float32)
    idx = 0
    for i in range(max_side - half):
        for j in range(band_len):
            mat_w[i, idx + j] = band_high[j]
        idx += band_len

    # band_len // 2 == 1  ->  end slice is a no-op, matching the torch code.
    mat_h0 = mat_h[0:full_h // 2, 0:full_h + band_len - 2]   # (h, 2h)
    mat_h1 = mat_h[0:full_w // 2, 0:full_w + band_len - 2]   # (w, 2w)
    mat_w0 = mat_w[0:full_h // 2, 0:full_h + band_len - 2]   # (h, 2h)
    mat_w1 = mat_w[0:full_w // 2, 0:full_w + band_len - 2]   # (w, 2w)

    low_0 = mat_h0            # (h, 2h)
    low_1 = mat_h1.T          # (2w, w)
    high_0 = mat_w0           # (h, 2h)
    high_1 = mat_w1.T         # (2w, w)
    return low_0, low_1, high_0, high_1


# -----------------------------------------------------------------------------
# Fused per-row synthesis matrix.
# -----------------------------------------------------------------------------
def build_row_map(h: int, w: int) -> np.ndarray:
    """(4w, 4w) map: one [ll | lh | hl | hh] row -> [even out row | odd out row]."""
    low0, low1, high0, high1 = build_haar_idwt_matrices(2 * h, 2 * w)
    l1t = low1.T        # (w, 2w)  == matrix_low_1.T in the torch forward
    h1t = high1.T       # (w, 2w)  == matrix_high_1.T

    # Haar (band_length == 2) => matrix_low_0 / matrix_high_0 are strictly
    # banded: row i has its two taps at columns (2i, 2i+1).  Extract the taps
    # (these weight the even/odd output rows) and sanity-check the structure.
    lt = (low0[0, 0], low0[0, 1])
    ht = (high0[0, 0], high0[0, 1])
    chk_l = np.zeros_like(low0)
    chk_h = np.zeros_like(high0)
    for i in range(low0.shape[0]):
        chk_l[i, 2 * i:2 * i + 2] = lt
        chk_h[i, 2 * i:2 * i + 2] = ht
    assert np.allclose(chk_l, low0) and np.allclose(chk_h, high0)

    W = np.zeros((4 * w, 4 * w), dtype=np.float32)
    for r in (0, 1):                               # r = output-row parity (2i + r)
        cols = slice(r * 2 * w, (r + 1) * 2 * w)
        W[0 * w:1 * w, cols] = lt[r] * l1t         # LL
        W[1 * w:2 * w, cols] = lt[r] * h1t         # LH
        W[2 * w:3 * w, cols] = ht[r] * l1t         # HL
        W[3 * w:4 * w, cols] = ht[r] * h1t         # HH
    return W


def build_folded_map(h: int, w: int, fold: int) -> np.ndarray:
    """Block-diagonal replication so `fold` consecutive sub-band rows are handled
    by a single (4*w*fold)-wide matmul (K = N = 256 when 4*w*fold == 256)."""
    Wr = build_row_map(h, w)                        # (4w, 4w)
    K = 4 * w * fold
    Wb = np.zeros((K, K), dtype=np.float32)
    for f in range(fold):
        for s in range(4):                          # LL, LH, HL, HH lane chunks
            Wb[(s * fold + f) * w:(s * fold + f + 1) * w,
               f * 4 * w:(f + 1) * 4 * w] = Wr[s * w:(s + 1) * w, :]
    return Wb


# -----------------------------------------------------------------------------
# Pallas kernel: one large block of flattened sub-band rows per grid step.
# -----------------------------------------------------------------------------
def idwt_kernel(ll_ref, lh_ref, hl_ref, hh_ref, wmat_ref, out_ref):
    x = jnp.concatenate(
        [ll_ref[...], lh_ref[...], hl_ref[...], hh_ref[...]], axis=-1)
    y = jnp.dot(x, wmat_ref[...], preferred_element_type=jnp.float32)
    out_ref[...] = y.astype(out_ref.dtype)


# -----------------------------------------------------------------------------
# Wrapper
# -----------------------------------------------------------------------------
def idwt_pallas(LL, LH, HL, HH, *, block_rows: int = 2048):
    B, C, h, w = LL.shape
    N = B * C
    total_rows = N * h                       # rows of the (rows, w) flattened view

    # Fold consecutive rows so the fused matmul is a full 256-wide MXU tile and
    # output stores are lane-dense (last dim becomes a multiple of 128).
    fold = max(1, 64 // w)
    kdim = 4 * w * fold

    folded_rows = -(-total_rows // fold)                       # ceil
    if folded_rows > block_rows:
        folded_rows = -(-folded_rows // block_rows) * block_rows
    tile_rows = min(block_rows, folded_rows)
    padded_total = folded_rows * fold
    row_pad = padded_total - total_rows

    wmat = jnp.asarray(build_folded_map(h, w, fold), dtype=jnp.float32)

    def prep(x):
        x = x.reshape(total_rows, w)               # free contiguous reshape
        if row_pad:
            x = jnp.pad(x, ((0, row_pad), (0, 0)))
        return x.reshape(folded_rows, fold * w)    # free contiguous reshape

    ll, lh, hl, hh = prep(LL), prep(LH), prep(HL), prep(HH)

    grid = (folded_rows // tile_rows,)
    band_spec = pl.BlockSpec((tile_rows, fold * w), lambda i: (i, 0))
    wmat_spec = pl.BlockSpec((kdim, kdim), lambda i: (0, 0))    # stays resident
    out_spec = pl.BlockSpec((tile_rows, kdim), lambda i: (i, 0))

    out = pl.pallas_call(
        idwt_kernel,
        out_shape=jax.ShapeDtypeStruct((folded_rows, kdim), LL.dtype),
        grid=grid,
        in_specs=[band_spec, band_spec, band_spec, band_spec, wmat_spec],
        out_specs=out_spec,
        compiler_params=pltpu.CompilerParams(
            dimension_semantics=("parallel",),
            vmem_limit_bytes=32 * 1024 * 1024),
    )(ll, lh, hl, hh, wmat)

    # (folded_rows, fold*4w) is byte-identical to (padded_total, 4w), which is
    # byte-identical to (images, 2h, 2w): undo with free reshapes + row slice.
    out = out.reshape(padded_total, 4 * w)
    if row_pad:
        out = out[:total_rows]
    return out.reshape(B, C, 2 * h, 2 * w)


# -----------------------------------------------------------------------------
# Pure-JAX reference (mirrors IDWTFunction.forward exactly).
# -----------------------------------------------------------------------------
def idwt_ref(LL, LH, HL, HH):
    _, _, h, w = LL.shape
    low0, low1, high0, high1 = build_haar_idwt_matrices(2 * h, 2 * w)
    low0 = jnp.asarray(low0, LL.dtype)
    low1 = jnp.asarray(low1, LL.dtype)
    high0 = jnp.asarray(high0, LL.dtype)
    high1 = jnp.asarray(high1, LL.dtype)
    L = jnp.matmul(LL, low1.T) + jnp.matmul(LH, high1.T)
    H = jnp.matmul(HL, low1.T) + jnp.matmul(HH, high1.T)
    return jnp.matmul(low0.T, L) + jnp.matmul(high0.T, H)


# TODO(synk): IDWTFunction.backward (autograd rule) is not implemented; this
# script covers the forward pass only.

if __name__ == "__main__":
    key = jax.random.PRNGKey(0)
    k1, k2, k3, k4 = jax.random.split(key, 4)
    shape = (2, 4, 16, 16)   # (B, C, h, w) sub-band shape -> output (2, 4, 32, 32)
    LL = jax.random.normal(k1, shape, dtype=jnp.float32)
    LH = jax.random.normal(k2, shape, dtype=jnp.float32)
    HL = jax.random.normal(k3, shape, dtype=jnp.float32)
    HH = jax.random.normal(k4, shape, dtype=jnp.float32)

    out = idwt_pallas(LL, LH, HL, HH)
    jax.block_until_ready(out)

    ref = idwt_ref(LL, LH, HL, HH)
    np.testing.assert_allclose(np.asarray(out), np.asarray(ref),
                               rtol=1e-5, atol=1e-5)
    print("KERNEL_OK")
</pallas_src>

<mosaic_0001>
module attributes {stable_mosaic.version = 11 : i64} {
  func.func @idwt_kernel(%arg0: i32, %arg1: memref<32x64xf32, #tpu.memory_space<vmem>>, %arg2: memref<32x64xf32, #tpu.memory_space<vmem>>, %arg3: memref<32x64xf32, #tpu.memory_space<vmem>>, %arg4: memref<32x64xf32, #tpu.memory_space<vmem>>, %arg5: memref<256x256xf32, #tpu.memory_space<vmem>>, %arg6: memref<32x256xf32, #tpu.memory_space<vmem>>) attributes {dimension_semantics = [#tpu.dimension_semantics<parallel>], iteration_bounds = array<i64: 1>, scalar_prefetch = 0 : i64, scratch_operands = 0 : i64, tpu.core_type = #tpu.core_type<tc>, window_params = [{transform_indices = @transform_0, window_bounds = array<i64: 32, 64>}, {transform_indices = @transform_1, window_bounds = array<i64: 32, 64>}, {transform_indices = @transform_2, window_bounds = array<i64: 32, 64>}, {transform_indices = @transform_3, window_bounds = array<i64: 32, 64>}, {pipeline_mode = #tpu.pipeline_mode<synchronous>, transform_indices = @transform_4, window_bounds = array<i64: 256, 256>}, {transform_indices = @transform_5, window_bounds = array<i64: 32, 256>}]} {
    %c0 = arith.constant 0 : index
    %c0_0 = arith.constant 0 : index
    %0 = vector.load %arg1[%c0, %c0_0] : memref<32x64xf32, #tpu.memory_space<vmem>>, vector<32x64xf32>
    %c0_1 = arith.constant 0 : index
    %c0_2 = arith.constant 0 : index
    %1 = vector.load %arg2[%c0_1, %c0_2] : memref<32x64xf32, #tpu.memory_space<vmem>>, vector<32x64xf32>
    %c0_3 = arith.constant 0 : index
    %c0_4 = arith.constant 0 : index
    %2 = vector.load %arg3[%c0_3, %c0_4] : memref<32x64xf32, #tpu.memory_space<vmem>>, vector<32x64xf32>
    %c0_5 = arith.constant 0 : index
    %c0_6 = arith.constant 0 : index
    %3 = vector.load %arg4[%c0_5, %c0_6] : memref<32x64xf32, #tpu.memory_space<vmem>>, vector<32x64xf32>
    %4 = tpu.concatenate %0, %1, %2, %3 in 1 : vector<32x64xf32>, vector<32x64xf32>, vector<32x64xf32>, vector<32x64xf32> -> vector<32x256xf32>
    %c0_7 = arith.constant 0 : index
    %c0_8 = arith.constant 0 : index
    %5 = vector.load %arg5[%c0_7, %c0_8] : memref<256x256xf32, #tpu.memory_space<vmem>>, vector<256x256xf32>
    %cst = arith.constant dense<0.000000e+00> : vector<32x256xf32>
    %6 = tpu.matmul %4, %5, %cst {dimension_numbers = #tpu.dot_dimension_numbers<[1], [0], [0], [1], [0, 0, 1, 1], [], []>} : vector<32x256xf32>, vector<256x256xf32>, vector<32x256xf32> -> vector<32x256xf32>
    %c0_9 = arith.constant 0 : index
    %c0_10 = arith.constant 0 : index
    %7 = vector.load %arg6[%c0_9, %c0_10] : memref<32x256xf32, #tpu.memory_space<vmem>>, vector<32x256xf32>
    tpu.vector_store %arg6[%c0_9, %c0_10], %6 {strides = array<i32>} : memref<32x256xf32, #tpu.memory_space<vmem>>, vector<32x256xf32>,
    return
  }
  func.func @transform_0(%arg0: i32) -> (i32, i32) {
    %c0_i32 = arith.constant 0 : i32
    %c0_i32_0 = arith.constant 0 : i32
    return %arg0, %c0_i32 : i32, i32
  }
  func.func @transform_1(%arg0: i32) -> (i32, i32) {
    %c0_i32 = arith.constant 0 : i32
    %c0_i32_0 = arith.constant 0 : i32
    return %arg0, %c0_i32 : i32, i32
  }
  func.func @transform_2(%arg0: i32) -> (i32, i32) {
    %c0_i32 = arith.constant 0 : i32
    %c0_i32_0 = arith.constant 0 : i32
    return %arg0, %c0_i32 : i32, i32
  }
  func.func @transform_3(%arg0: i32) -> (i32, i32) {
    %c0_i32 = arith.constant 0 : i32
    %c0_i32_0 = arith.constant 0 : i32
    return %arg0, %c0_i32 : i32, i32
  }
  func.func @transform_4(%arg0: i32) -> (i32, i32) {
    %c0_i32 = arith.constant 0 : i32
    %c0_i32_0 = arith.constant 0 : i32
    %c0_i32_1 = arith.constant 0 : i32
    return %c0_i32, %c0_i32_0 : i32, i32
  }
  func.func @transform_5(%arg0: i32) -> (i32, i32) {
    %c0_i32 = arith.constant 0 : i32
    %c0_i32_0 = arith.constant 0 : i32
    return %arg0, %c0_i32 : i32, i32
  }
}

</mosaic_0001>

<llo_original>
// kernel: tpu_custom_call.1
$region0: #{tpu_custom_call.1}
  #allocation0 [shape = 'u32[]', space=smem, size = 0x4, offset = 0x4, fixed_abs, tag = 'smem constant byte address 0x4 - core index']
  #allocation1 [shape = 'u32[144,128]{1,0:T(1,128)}', space=vmem, size = 0x12000, scoped, tag = 'internal scratch']
  %s0 = inlined_call_operand.hbm [shape: f32[32,64], index: 0, kind: input, shape index: {}]
  %s1 = inlined_call_operand.hbm [shape: f32[32,64], index: 1, kind: input, shape index: {}]
  %s2 = inlined_call_operand.hbm [shape: f32[32,64], index: 2, kind: input, shape index: {}]
  %s3 = inlined_call_operand.hbm [shape: f32[32,64], index: 3, kind: input, shape index: {}]
  %s4 = inlined_call_operand.hbm [shape: f32[256,256], index: 4, kind: input, shape index: {}]
  %s5 = inlined_call_operand.hbm [shape: f32[32,256], index: 5, kind: output, shape index: {}]
  %s6 = sld [smem:[#allocation0]]
  $region50: #{tpu_custom_call.1} parent=0
    _
  %s8 = ssub.s32 1, %s6
  %s9 = scalar_select 0, %s8, %s6
  $region1: #{tpu_custom_call.1} parent=0
    #allocation2 [shape = 'u8[16384]{0}', space=vmem, size = 0x4000, scoped, tag = 'input window, operand 0, single buffered']
    #allocation3 [shape = 's32[1]{0}', space=sflag, size = 0x4, scoped, tag = 'scoped memory for tpu_custom_call.1']
    #allocation4 [shape = 's32[1]{0}', space=sflag, size = 0x4, scoped, tag = 'scoped memory for tpu_custom_call.1']
    #allocation5 [shape = 'u8[16384]{0}', space=vmem, size = 0x4000, scoped, tag = 'input window, operand 1, single buffered']
    #allocation6 [shape = 's32[1]{0}', space=sflag, size = 0x4, scoped, tag = 'scoped memory for tpu_custom_call.1']
    #allocation7 [shape = 'u8[16384]{0}', space=vmem, size = 0x4000, scoped, tag = 'input window, operand 2, single buffered']
    #allocation8 [shape = 'u8[16384]{0}', space=vmem, size = 0x4000, scoped, tag = 'input window, operand 3, single buffered']
    #allocation9 [shape = 's32[1]{0}', space=sflag, size = 0x4, scoped, tag = 'scoped memory for tpu_custom_call.1']
    #allocation10 [shape = 'u8[262144]{0}', space=vmem, size = 0x40000, scoped, tag = 'input window, operand 4, single buffered']
    #allocation11 [shape = 'u8[32768]{0}', space=vmem, size = 0x8000, scoped, tag = 'output window, operand 0, single buffered']
    %10 = vsyncpa [#allocation3], 0
    %11 = vsyncpa [#allocation6], 0
    %12 = vsyncpa [#allocation9], 0
    %13 = vsyncpa [#allocation4], 0
    // Predicated region
    $region2: #{tpu_custom_call.1} parent=1 // pred_check
      _
    $region3: #{tpu_custom_call.1} parent=1 // pred_check_branch
      %15 = sbr.rel (0) target = $region5
    $region4: #{tpu_custom_call.1} parent=1 // pred_region
      %s17 = ssub.s32 512, 512
      %18 = vsyncadd [#allocation3], %s17
      %s19 = sshll.u32 [#allocation2], 4
      %s20 = int_to_ptr.vmem [resolvable:$true] %s19
      %25 = dma.hbm_to_vmem [thread:$0]  %s0, 512, %s20, [#allocation3], 128, 128, 8
    $region5: #{tpu_custom_call.1} parent=1 // pred_fallthru
      _
    // Predicated region
    $region6: #{tpu_custom_call.1} parent=1 // pred_check
      _
    $region7: #{tpu_custom_call.1} parent=1 // pred_check_branch
      %27 = sbr.rel (0) target = $region9
    $region8: #{tpu_custom_call.1} parent=1 // pred_region
      %s29 = ssub.s32 512, 512
      %30 = vsyncadd [#allocation6], %s29
      %s31 = sshll.u32 [#allocation5], 4
      %s32 = int_to_ptr.vmem [resolvable:$true] %s31
      %37 = dma.hbm_to_vmem [thread:$0]  %s1, 512, %s32, [#allocation6], 128, 128, 8
    $region9: #{tpu_custom_call.1} parent=1 // pred_fallthru
      _
    // Predicated region
    $region10: #{tpu_custom_call.1} parent=1 // pred_check
      _
    $region11: #{tpu_custom_call.1} parent=1 // pred_check_branch
      %39 = sbr.rel (0) target = $region13
    $region12: #{tpu_custom_call.1} parent=1 // pred_region
      %s41 = ssub.s32 512, 512
      %42 = vsyncadd [#allocation6], %s41
      %s43 = sshll.u32 [#allocation7], 4
      %s44 = int_to_ptr.vmem [resolvable:$true] %s43
      %49 = dma.hbm_to_vmem [thread:$0]  %s2, 512, %s44, [#allocation6], 128, 128, 8
    $region13: #{tpu_custom_call.1} parent=1 // pred_fallthru
      _
    // Predicated region
    $region14: #{tpu_custom_call.1} parent=1 // pred_check
      _
    $region15: #{tpu_custom_call.1} parent=1 // pred_check_branch
      %51 = sbr.rel (0) target = $region17
    $region16: #{tpu_custom_call.1} parent=1 // pred_region
      %s53 = ssub.s32 512, 512
      %54 = vsyncadd [#allocation9], %s53
      %s55 = sshll.u32 [#allocation8], 4
      %s56 = int_to_ptr.vmem [resolvable:$true] %s55
      %61 = dma.hbm_to_vmem [thread:$0]  %s3, 512, %s56, [#allocation9], 128, 128, 8
    $region17: #{tpu_custom_call.1} parent=1 // pred_fallthru
      _
    // Predicated region
    $region18: #{tpu_custom_call.1} parent=1 // pred_check
      _
    $region19: #{tpu_custom_call.1} parent=1 // pred_check_branch
      %63 = sbr.rel (0) target = $region21
    $region20: #{tpu_custom_call.1} parent=1 // pred_region
      %s65 = ssub.s32 8192, 8192
      %66 = vsyncadd [#allocation9], %s65
      %s67 = sshll.u32 [#allocation10], 4
      %s68 = int_to_ptr.vmem [resolvable:$true] %s67
      %73 = dma.hbm_to_vmem [thread:$0]  %s4, 8192, %s68, [#allocation9], 256, 256, 16
    $region21: #{tpu_custom_call.1} parent=1 // pred_fallthru
      _
    // Predicated region
    $region22: #{tpu_custom_call.1} parent=1 // pred_check
      _
    $region23: #{tpu_custom_call.1} parent=1 // pred_check_branch
      %75 = sbr.rel (0) target = $region25
    $region24: #{tpu_custom_call.1} parent=1 // pred_region
      %76 = dma.done [#allocation3], 512
    $region25: #{tpu_custom_call.1} parent=1 // pred_fallthru
      _
    // Predicated region
    $region26: #{tpu_custom_call.1} parent=1 // pred_check
      _
    $region27: #{tpu_custom_call.1} parent=1 // pred_check_branch
      %78 = sbr.rel (0) target = $region29
    $region28: #{tpu_custom_call.1} parent=1 // pred_region
      %79 = dma.done [#allocation6], 512
    $region29: #{tpu_custom_call.1} parent=1 // pred_fallthru
      _
    // Predicated region
    $region30: #{tpu_custom_call.1} parent=1 // pred_check
      _
    $region31: #{tpu_custom_call.1} parent=1 // pred_check_branch
      %81 = sbr.rel (0) target = $region33
    $region32: #{tpu_custom_call.1} parent=1 // pred_region
      %82 = dma.done [#allocation6], 512
    $region33: #{tpu_custom_call.1} parent=1 // pred_fallthru
      _
    // Predicated region
    $region34: #{tpu_custom_call.1} parent=1 // pred_check
      _
    $region35: #{tpu_custom_call.1} parent=1 // pred_check_branch
      %84 = sbr.rel (0) target = $region37
    $region36: #{tpu_custom_call.1} parent=1 // pred_region
      %85 = dma.done [#allocation9], 512
    $region37: #{tpu_custom_call.1} parent=1 // pred_fallthru
      _
    // Predicated region
    $region38: #{tpu_custom_call.1} parent=1 // pred_check
      _
    $region39: #{tpu_custom_call.1} parent=1 // pred_check_branch
      %87 = sbr.rel (0) target = $region41
    $region40: #{tpu_custom_call.1} parent=1 // pred_region
      %88 = dma.done [#allocation9], 8192
    $region41: #{tpu_custom_call.1} parent=1 // pred_fallthru
      _
    %v89 = vld [vmem:[#allocation2] sm:$0xff]
    %v90 = vld [vmem:[#allocation2 + $0x8] sm:$0xff]
    %v91 = vld [vmem:[#allocation2 + $0x10] sm:$0xff]
    %v92 = vld [vmem:[#allocation2 + $0x18] sm:$0xff]
    %v93 = vld [vmem:[#allocation5] sm:$0xff]
    %v94 = vld [vmem:[#allocation5 + $0x8] sm:$0xff]
    %v95 = vld [vmem:[#allocation5 + $0x10] sm:$0xff]
    %v96 = vld [vmem:[#allocation5 + $0x18] sm:$0xff]
    %v97 = vld [vmem:[#allocation7] sm:$0xff]
    %v98 = vld [vmem:[#allocation7 + $0x8] sm:$0xff]
    %v99 = vld [vmem:[#allocation7 + $0x10] sm:$0xff]
    %v100 = vld [vmem:[#allocation7 + $0x18] sm:$0xff]
    %v101 = vld [vmem:[#allocation8] sm:$0xff]
    %v102 = vld [vmem:[#allocation8 + $0x8] sm:$0xff]
    %v103 = vld [vmem:[#allocation8 + $0x10] sm:$0xff]
    %v104 = vld [vmem:[#allocation8 + $0x18] sm:$0xff]
    %109 = vrot.lane.b32.xlu0 %v93, 64
    %v110 = vpop.permute.xlu0 %109
    %111 = vrot.lane.b32.xlu0 %v94, 64
    %v112 = vpop.permute.xlu0 %111
    %113 = vrot.lane.b32.xlu0 %v95, 64
    %v114 = vpop.permute.xlu0 %113
    %115 = vrot.lane.b32.xlu0 %v96, 64
    %v116 = vpop.permute.xlu0 %115
    %125 = vrot.lane.b32.xlu0 %v101, 64
    %v126 = vpop.permute.xlu0 %125
    %127 = vrot.lane.b32.xlu0 %v102, 64
    %v128 = vpop.permute.xlu0 %127
    %129 = vrot.lane.b32.xlu0 %v103, 64
    %v130 = vpop.permute.xlu0 %129
    %131 = vrot.lane.b32.xlu0 %v104, 64
    %v132 = vpop.permute.xlu0 %131
    %vm137 = vcmask 523264
    %v138 = vsel %vm137, %v89, %v110
    %v139 = vsel %vm137, %v90, %v112
    %v140 = vsel %vm137, %v91, %v114
    %v141 = vsel %vm137, %v92, %v116
    %v142 = vsel %vm137, %v97, %v126
    %v143 = vsel %vm137, %v98, %v128
    %v144 = vsel %vm137, %v99, %v130
    %v145 = vsel %vm137, %v100, %v132
    %v146 = vld [vmem:[#allocation10] sm:$0xff]
    %v147 = vld [vmem:[#allocation10 + $0x8] sm:$0xff]
    %v148 = vld [vmem:[#allocation10 + $0x10] sm:$0xff]
    %v149 = vld [vmem:[#allocation10 + $0x18] sm:$0xff]
    %v150 = vld [vmem:[#allocation10 + $0x20] sm:$0xff]
    %v151 = vld [vmem:[#allocation10 + $0x28] sm:$0xff]
    %v152 = vld [vmem:[#allocation10 + $0x30] sm:$0xff]
    %v153 = vld [vmem:[#allocation10 + $0x38] sm:$0xff]
    %v154 = vld [vmem:[#allocation10 + $0x40] sm:$0xff]
    %v155 = vld [vmem:[#allocation10 + $0x48] sm:$0xff]
    %v156 = vld [vmem:[#allocation10 + $0x50] sm:$0xff]
    %v157 = vld [vmem:[#allocation10 + $0x58] sm:$0xff]
    %v158 = vld [vmem:[#allocation10 + $0x60] sm:$0xff]
    %v159 = vld [vmem:[#allocation10 + $0x68] sm:$0xff]
    %v160 = vld [vmem:[#allocation10 + $0x70] sm:$0xff]
    %v161 = vld [vmem:[#allocation10 + $0x78] sm:$0xff]
    %v162 = vld [vmem:[#allocation10 + $0x80] sm:$0xff]
    %v163 = vld [vmem:[#allocation10 + $0x88] sm:$0xff]
    %v164 = vld [vmem:[#allocation10 + $0x90] sm:$0xff]
    %v165 = vld [vmem:[#allocation10 + $0x98] sm:$0xff]
    %v166 = vld [vmem:[#allocation10 + $0xa0] sm:$0xff]
    %v167 = vld [vmem:[#allocation10 + $0xa8] sm:$0xff]
    %v168 = vld [vmem:[#allocation10 + $0xb0] sm:$0xff]
    %v169 = vld [vmem:[#allocation10 + $0xb8] sm:$0xff]
    %v170 = vld [vmem:[#allocation10 + $0xc0] sm:$0xff]
    %v171 = vld [vmem:[#allocation10 + $0xc8] sm:$0xff]
    %v172 = vld [vmem:[#allocation10 + $0xd0] sm:$0xff]
    %v173 = vld [vmem:[#allocation10 + $0xd8] sm:$0xff]
    %v174 = vld [vmem:[#allocation10 + $0xe0] sm:$0xff]
    %v175 = vld [vmem:[#allocation10 + $0xe8] sm:$0xff]
    %v176 = vld [vmem:[#allocation10 + $0xf0] sm:$0xff]
    %v177 = vld [vmem:[#allocation10 + $0xf8] sm:$0xff]
    %v178 = vld [vmem:[#allocation10 + $0x100] sm:$0xff]
    %v179 = vld [vmem:[#allocation10 + $0x108] sm:$0xff]
    %v180 = vld [vmem:[#allocation10 + $0x110] sm:$0xff]
    %v181 = vld [vmem:[#allocation10 + $0x118] sm:$0xff]
    %v182 = vld [vmem:[#allocation10 + $0x120] sm:$0xff]
    %v183 = vld [vmem:[#allocation10 + $0x128] sm:$0xff]
    %v184 = vld [vmem:[#allocation10 + $0x130] sm:$0xff]
    %v185 = vld [vmem:[#allocation10 + $0x138] sm:$0xff]
    %v186 = vld [vmem:[#allocation10 + $0x140] sm:$0xff]
    %v187 = vld [vmem:[#allocation10 + $0x148] sm:$0xff]
    %v188 = vld [vmem:[#allocation10 + $0x150] sm:$0xff]
    %v189 = vld [vmem:[#allocation10 + $0x158] sm:$0xff]
    %v190 = vld [vmem:[#allocation10 + $0x160] sm:$0xff]
    %v191 = vld [vmem:[#allocation10 + $0x168] sm:$0xff]
    %v192 = vld [vmem:[#allocation10 + $0x170] sm:$0xff]
    %v193 = vld [vmem:[#allocation10 + $0x178] sm:$0xff]
    %v194 = vld [vmem:[#allocation10 + $0x180] sm:$0xff]
    %v195 = vld [vmem:[#allocation10 + $0x188] sm:$0xff]
    %v196 = vld [vmem:[#allocation10 + $0x190] sm:$0xff]
    %v197 = vld [vmem:[#allocation10 + $0x198] sm:$0xff]
    %v198 = vld [vmem:[#allocation10 + $0x1a0] sm:$0xff]
    %v199 = vld [vmem:[#allocation10 + $0x1a8] sm:$0xff]
    %v200 = vld [vmem:[#allocation10 + $0x1b0] sm:$0xff]
    %v201 = vld [vmem:[#allocation10 + $0x1b8] sm:$0xff]
    %v202 = vld [vmem:[#allocation10 + $0x1c0] sm:$0xff]
    %v203 = vld [vmem:[#allocation10 + $0x1c8] sm:$0xff]
    %v204 = vld [vmem:[#allocation10 + $0x1d0] sm:$0xff]
    %v205 = vld [vmem:[#allocation10 + $0x1d8] sm:$0xff]
    %v206 = vld [vmem:[#allocation10 + $0x1e0] sm:$0xff]
    %v207 = vld [vmem:[#allocation10 + $0x1e8] sm:$0xff]
    %v208 = vld [vmem:[#allocation10 + $0x1f0] sm:$0xff]
    %v209 = vld [vmem:[#allocation10 + $0x1f8] sm:$0xff]
    %210 = vmatprep.subr.mxu0 %v147
    %211 = vmatpush1.msra.mxu0 %v146
    %212 = vmatprep.subr.mxu0 %v149
    %213 = vmatpush1.msra.mxu0 %v148
    %214 = vmatprep.subr.mxu0 %v151
    %215 = vmatpush1.msra.mxu0 %v150
    %216 = vmatprep.subr.mxu0 %v153
    %217 = vmatpush1.msra.mxu0 %v152
    %218 = vmatprep.subr.mxu0 %v155
    %219 = vmatpush1.msra.mxu0 %v154
    %220 = vmatprep.subr.mxu0 %v157
    %221 = vmatpush1.msra.mxu0 %v156
    %222 = vmatprep.subr.mxu0 %v159
    %223 = vmatpush1.msra.mxu0 %v158
    %224 = vmatprep.subr.mxu0 %v161
    %225 = vmatpush1.msra.mxu0 %v160
    %226 = vmatprep.subr.mxu0 %v163
    %227 = vmatpush1.msra.mxu0 %v162
    %228 = vmatprep.subr.mxu0 %v165
    %229 = vmatpush1.msra.mxu0 %v164
    %230 = vmatprep.subr.mxu0 %v167
    %231 = vmatpush1.msra.mxu0 %v166
    %232 = vmatprep.subr.mxu0 %v169
    %233 = vmatpush1.msra.mxu0 %v168
    %234 = vmatprep.subr.mxu0 %v171
    %235 = vmatpush1.msra.mxu0 %v170
    %236 = vmatprep.subr.mxu0 %v173
    %237 = vmatpush1.msra.mxu0 %v172
    %238 = vmatprep.subr.mxu0 %v175
    %239 = vmatpush1.msra.mxu0 %v174
    %240 = vmatprep.subr.mxu0 %v177
    %241 = vmatpush1.msra.mxu0 %v176
    %242 = vmatprep.subr.mxu0 %v179
    %243 = vmatpush1.msra.mxu0 %v178
    %244 = vmatprep.subr.mxu0 %v181
    %245 = vmatpush1.msra.mxu0 %v180
    %246 = vmatprep.subr.mxu0 %v183
    %247 = vmatpush1.msra.mxu0 %v182
    %248 = vmatprep.subr.mxu0 %v185
    %249 = vmatpush1.msra.mxu0 %v184
    %250 = vmatprep.subr.mxu0 %v187
    %251 = vmatpush1.msra.mxu0 %v186
    %252 = vmatprep.subr.mxu0 %v189
    %253 = vmatpush1.msra.mxu0 %v188
    %254 = vmatprep.subr.mxu0 %v191
    %255 = vmatpush1.msra.mxu0 %v190
    %256 = vmatprep.subr.mxu0 %v193
    %257 = vmatpush1.msra.mxu0 %v192
    %258 = vmatprep.subr.mxu0 %v195
    %259 = vmatpush1.msra.mxu0 %v194
    %260 = vmatprep.subr.mxu0 %v197
    %261 = vmatpush1.msra.mxu0 %v196
    %262 = vmatprep.subr.mxu0 %v199
    %263 = vmatpush1.msra.mxu0 %v198
    %264 = vmatprep.subr.mxu0 %v201
    %265 = vmatpush1.msra.mxu0 %v200
    %266 = vmatprep.subr.mxu0 %v203
    %267 = vmatpush1.msra.mxu0 %v202
    %268 = vmatprep.subr.mxu0 %v205
    %269 = vmatpush1.msra.mxu0 %v204
    %270 = vmatprep.subr.mxu0 %v207
    %271 = vmatpush1.msra.mxu0 %v206
    %272 = vmatprep.subr.mxu0 %v209
    %273 = vmatpush1.msra.mxu0 %v208
    %274 = vmatprep.mubr.f32.mxu0 %v142
    %275 = vmatmul.mubr.f32.gmra.mrb[0].mxu0 %v138
    %v276 = vpop.f32.mrb[0].mxu0
    %v277 = vadd.f32 0.0, %v276
    %v278 = vpop.f32.mrb[0].mxu0
    %v279 = vadd.f32 0.0, %v278
    %280 = vmatprep.mubr.f32.mxu0 %v143
    %281 = vmatmul.mubr.f32.gmra.mrb[0].mxu0 %v139
    %v282 = vpop.f32.mrb[0].mxu0
    %v283 = vadd.f32 0.0, %v282
    %v284 = vpop.f32.mrb[0].mxu0
    %v285 = vadd.f32 0.0, %v284
    %286 = vmatprep.mubr.f32.mxu0 %v144
    %287 = vmatmul.mubr.f32.gmra.mrb[0].mxu0 %v140
    %v288 = vpop.f32.mrb[0].mxu0
    %v289 = vadd.f32 0.0, %v288
    %v290 = vpop.f32.mrb[0].mxu0
    %v291 = vadd.f32 0.0, %v290
    %292 = vmatprep.mubr.f32.mxu0 %v145
    %293 = vmatmul.mubr.f32.gmra.mrb[0].mxu0 %v141
    %v294 = vpop.f32.mrb[0].mxu0
    %v295 = vadd.f32 0.0, %v294
    %v296 = vpop.f32.mrb[0].mxu0
    %v297 = vadd.f32 0.0, %v296
    %298 = vdwg.mxu0
    %299 = vst [vmem:[#allocation11] sm:$0xff] %v277
    %300 = vst [vmem:[#allocation11 + $0x8] sm:$0xff] %v279
    %301 = vst [vmem:[#allocation11 + $0x10] sm:$0xff] %v283
    %302 = vst [vmem:[#allocation11 + $0x18] sm:$0xff] %v285
    %303 = vst [vmem:[#allocation11 + $0x20] sm:$0xff] %v289
    %304 = vst [vmem:[#allocation11 + $0x28] sm:$0xff] %v291
    %305 = vst [vmem:[#allocation11 + $0x30] sm:$0xff] %v295
    %306 = vst [vmem:[#allocation11 + $0x38] sm:$0xff] %v297
    // Predicated region
    $region42: #{tpu_custom_call.1} parent=1 // pred_check
      _
    $region43: #{tpu_custom_call.1} parent=1 // pred_check_branch
      %308 = sbr.rel (0) target = $region45
    $region44: #{tpu_custom_call.1} parent=1 // pred_region
      %s310 = ssub.s32 1024, 1024
      %311 = vsyncadd [#allocation4], %s310
      %s312 = sshll.u32 [#allocation11], 4
      %s313 = int_to_ptr.vmem [resolvable:$true] %s312
      %318 = dma.vmem_to_hbm [thread:$0]  %s313, 1024, %s5, [#allocation4], 256, 256, 16
    $region45: #{tpu_custom_call.1} parent=1 // pred_fallthru
      _
    // Predicated region
    $region46: #{tpu_custom_call.1} parent=1 // pred_check
      _
    $region47: #{tpu_custom_call.1} parent=1 // pred_check_branch
      %320 = sbr.rel (0) target = $region49
    $region48: #{tpu_custom_call.1} parent=1 // pred_region
      %321 = dma.done [#allocation4], 1024
    $region49: #{tpu_custom_call.1} parent=1 // pred_fallthru
      _
    %322 = vsyncpa [#allocation3], 1
    %323 = vsyncpa [#allocation6], 1
    %324 = vsyncpa [#allocation9], 1
    %325 = vsyncpa [#allocation4], 1

</llo_original>
